<compile_context>
chip_gen: v5e
topology: v5e:2x2
jax: 0.10.0
libtpu: 0.0.40
codegen_flags: <defaults>
</compile_context>

<pallas_src>
import functools

import jax
import jax.numpy as jnp
from jax import lax
from jax.experimental import pallas as pl
from jax.experimental.pallas import tpu as pltpu

_BN_EPS = 1e-5


def _round_up(v, m):
    return (v + m - 1) // m * m


def _neighbor(v, direction, boundary_mask, use_roll):
    """direction=+1: result[:, j] = v[:, j-1]; direction=-1: result[:, j] = v[:, j+1].
    Lanes where boundary_mask is True (per-sample sequence edges, which also cover the
    whole-tile wrap-around) are zeroed."""
    c, m = v.shape
    if use_roll:
        shift = 1 if direction > 0 else m - 1      # XLU lane rotate (off the VPU/store slots)
        s = pltpu.roll(v, shift=shift, axis=1)
    else:
        zero = jnp.zeros((c, 1), v.dtype)
        s = (jnp.concatenate([zero, v[:, : m - 1]], axis=1) if direction > 0
             else jnp.concatenate([v[:, 1:], zero], axis=1))
    return jnp.where(boundary_mask, 0, s)


def _resblock_kernel(*refs, stride, l_out, identity, use_roll):
    slab_ref = refs[-1]                 # (3*C_max, M) scratch reused for both tap slabs
    o_ref = refs[-2]
    x_ref = refs[0]
    if identity:
        s1_ref, h1_ref, w1_ref, s2_ref, h2_ref, w2_ref, bf_ref = refs[1:8]
        wd_ref = None
    else:
        s1_ref, h1_ref, w1_ref, s2_ref, h2_ref, w2_ref, bf_ref, wd_ref = refs[1:9]

    f32 = jnp.float32
    act_dt = slab_ref.dtype
    c_in = s1_ref.shape[0]
    c_out = o_ref.shape[0]
    m = o_ref.shape[1]                  # batch_tile * l_out lanes

    # Per-sample boundary masks, hoisted once and shared by both 3-tap slabs.
    col = lax.broadcasted_iota(jnp.int32, (1, m), 1) % l_out
    is_start = col == 0
    is_end = col == l_out - 1

    s1 = s1_ref[...]
    h1 = h1_ref[...]
    if stride == 1:
        y = jnp.maximum(x_ref[...].astype(f32) * s1 + h1, 0.0)          # bn1 + relu
        slab_ref[0:c_in, :] = _neighbor(y, +1, is_start, use_roll).astype(act_dt)
        slab_ref[c_in:2 * c_in, :] = y.astype(act_dt)
        slab_ref[2 * c_in:3 * c_in, :] = _neighbor(y, -1, is_end, use_roll).astype(act_dt)
    else:
        # Even/odd lanes were de-interleaved by the wrapper in one layout pass.
        # out[t] needs y[2t-1] (previous odd), y[2t] (even), y[2t+1] (odd).
        ye = jnp.maximum(x_ref[0].astype(f32) * s1 + h1, 0.0)
        yo = jnp.maximum(x_ref[1].astype(f32) * s1 + h1, 0.0)
        slab_ref[0:c_in, :] = _neighbor(yo, +1, is_start, use_roll).astype(act_dt)
        slab_ref[c_in:2 * c_in, :] = ye.astype(act_dt)
        slab_ref[2 * c_in:3 * c_in, :] = yo.astype(act_dt)

    # conv1 (3 taps fused into one MXU matmul; bias folded into bn2 shift) -> bn2 -> relu
    z = jnp.dot(w1_ref[...], slab_ref[0:3 * c_in, :], preferred_element_type=f32)
    z = jnp.maximum(z * s2_ref[...] + h2_ref[...], 0.0)
    # TODO(synk): Dropout1d(0.4) is the identity in eval mode; training-mode channel
    # dropout / batch-statistics BatchNorm are not modeled.

    # conv2 (stride 1, 3 taps fused); conv2 + downsample biases pre-folded into bf.
    slab_ref[0:c_out, :] = _neighbor(z, +1, is_start, use_roll).astype(act_dt)
    slab_ref[c_out:2 * c_out, :] = z.astype(act_dt)
    slab_ref[2 * c_out:3 * c_out, :] = _neighbor(z, -1, is_end, use_roll).astype(act_dt)
    out = jnp.dot(w2_ref[...], slab_ref[0:3 * c_out, :], preferred_element_type=f32)
    out = out + bf_ref[...]

    # Residual path (Identity / 1x1 conv), specialized at trace time.
    x_res = x_ref[...] if stride == 1 else x_ref[0]
    if identity:
        out = out + x_res.astype(f32)
    else:
        out = out + jnp.dot(wd_ref[...], x_res, preferred_element_type=f32)
    o_ref[...] = out.astype(o_ref.dtype)


def _vmem_capacity_bytes():
    try:
        cap = getattr(pltpu.get_tpu_info(), "vmem_capacity_bytes", None)
        if cap:
            return int(cap)
    except Exception:
        pass
    return 64 << 20            # conservative: v7x physical VMEM per TensorCore


def _step_footprint_bytes(b_tile, *, L, l_out, c_in_p, c_out_p, act_bytes):
    """Conservative VMEM bytes for one grid step: double-buffered input/output blocks,
    the shared 3-tap slab scratch, the (at most double-buffered) weight/scale blocks
    and the in-kernel f32 intermediates (y/ye+yo, rolled taps, z, conv outputs)."""
    m = b_tile * l_out
    io = 2 * (c_in_p * b_tile * L + c_out_p * m) * act_bytes     # pipelined blocks
    slab = 3 * max(c_in_p, c_out_p) * m * act_bytes              # persistent scratch
    tmp = (3 * c_in_p + 3 * c_out_p) * m * 4                     # f32 temporaries
    consts = ((3 * c_in_p + 3 * c_out_p + c_in_p) * c_out_p * act_bytes
              + (2 * c_in_p + 3 * c_out_p) * 4)
    return io + slab + tmp + 2 * consts


def _pick_b_tile(n, *, L, l_out, c_in_p, c_out_p, act_bytes, budget_bytes):
    """Largest batch tile that divides n, keeps every block lane-dense (multiple of
    128 lanes, or the full array as a fallback), fits the true per-step footprint in
    the budget, and -- when possible -- leaves >= 2 grid steps so both v7x
    TensorCores get work under dimension_semantics=("parallel",)."""
    legal = [bt for bt in range(1, n + 1)
             if n % bt == 0 and ((bt * l_out) % 128 == 0 or bt == n)]
    fits = [bt for bt in legal
            if _step_footprint_bytes(bt, L=L, l_out=l_out, c_in_p=c_in_p,
                                     c_out_p=c_out_p, act_bytes=act_bytes) <= budget_bytes]
    pool = fits if fits else [min(legal)]
    multi = [bt for bt in pool if n // bt >= 2]
    return max(multi) if multi else max(pool)


def residual_block_forward(x, p, *, b_tile=None, act_dtype=jnp.float32):
    """Eval-mode forward of ResidualBlock.  act_dtype=jnp.bfloat16 halves HBM/VMEM
    traffic for activations/weights (recommended on v6e/v7x); BN folding and all
    matmul accumulation stay in float32."""
    n, c_in, L = x.shape
    c_out = p["w1"].shape[0]
    stride = p["stride"]
    identity = p["identity"]
    l_out = (L + 2 - 3) // stride + 1
    if stride == 2 and L % 2:
        # TODO(synk): odd-length stride-2 input needs one extra right-tap mask; unused here.
        raise NotImplementedError("stride-2 path requires an even input length")

    f32 = jnp.float32
    act_bytes = jnp.dtype(act_dtype).itemsize
    sub = 8 if act_bytes == 4 else 16                    # f32 / bf16 sublane tile
    c_in_p = _round_up(c_in, sub)
    c_out_p = _round_up(c_out, sub)
    c_max_p = max(c_in_p, c_out_p)

    # BatchNorm (inference) folded to per-channel scale/shift; conv1 bias folded into
    # the bn2 shift; conv2 + downsample biases folded into one final bias.  Channel
    # dims zero-padded once here so every block / dot output is sublane-aligned.
    inv1 = p["g1"] / jnp.sqrt(p["v1"] + _BN_EPS)
    s1 = jnp.zeros((c_in_p, 1), f32).at[:c_in, 0].set(inv1)
    h1 = jnp.zeros((c_in_p, 1), f32).at[:c_in, 0].set(p["be1"] - p["m1"] * inv1)
    inv2 = p["g2"] / jnp.sqrt(p["v2"] + _BN_EPS)
    s2 = jnp.zeros((c_out_p, 1), f32).at[:c_out, 0].set(inv2)
    h2 = jnp.zeros((c_out_p, 1), f32).at[:c_out, 0].set(
        p["be2"] - p["m2"] * inv2 + inv2 * p["b1"])

    # Fuse the 3 conv taps into one (C_out, 3*C) matrix; column blocks ordered
    # [k=0 | k=1 | k=2] to match the stacked activation slab built in-kernel.
    w1p = jnp.zeros((c_out_p, c_in_p, 3), f32).at[:c_out, :c_in, :].set(p["w1"])
    w1f = jnp.transpose(w1p, (0, 2, 1)).reshape(c_out_p, 3 * c_in_p).astype(act_dtype)
    w2p = jnp.zeros((c_out_p, c_out_p, 3), f32).at[:c_out, :c_out, :].set(p["w2"])
    w2f = jnp.transpose(w2p, (0, 2, 1)).reshape(c_out_p, 3 * c_out_p).astype(act_dtype)

    if identity:
        bf = jnp.zeros((c_out_p, 1), f32).at[:c_out, 0].set(p["b2"])
        extra = []
    else:
        bf = jnp.zeros((c_out_p, 1), f32).at[:c_out, 0].set(p["b2"] + p["bd"])
        wd = jnp.zeros((c_out_p, c_in_p), f32).at[:c_out, :c_in].set(
            p["wd"][:, :, 0]).astype(act_dtype)
        extra = [wd]

    # Generation-aware VMEM budget (64 MiB physical on v7x, 128 MiB on v5e/v6e) with
    # headroom, passed explicitly as vmem_limit_bytes so large tiles are usable
    # (scoped defaults are only 16/32 MiB).
    vmem_cap = _vmem_capacity_bytes()
    vmem_limit = max(min(int(vmem_cap * 0.75), 96 << 20), 32 << 20)
    budget = int(vmem_limit * 0.85)
    if b_tile is None:
        b_tile = _pick_b_tile(n, L=L, l_out=l_out, c_in_p=c_in_p, c_out_p=c_out_p,
                              act_bytes=act_bytes, budget_bytes=budget)
    assert n % b_tile == 0
    grid = (n // b_tile,)

    # Layout plumbing (single pass each): channel-major, lane-dense slabs.  The
    # stride-2 even/odd de-interleave is fused into the same transpose (one layout op)
    # instead of two extra strided gathers.
    # TODO(synk): when chaining blocks, keep activations in this channel-major padded
    # layout between calls to skip the NCL<->(C, N*L) transposes entirely.
    xc = x.astype(act_dtype)
    if stride == 1:
        xt = jnp.transpose(xc, (1, 0, 2)).reshape(c_in, n * L)
        if c_in_p != c_in:
            xt = jnp.pad(xt, ((0, c_in_p - c_in), (0, 0)))
        x_arrays = [xt]
    else:
        xeo = jnp.transpose(xc.reshape(n, c_in, l_out, 2), (3, 1, 0, 2))
        xeo = xeo.reshape(2, c_in, n * l_out)
        if c_in_p != c_in:
            xeo = jnp.pad(xeo, ((0, 0), (0, c_in_p - c_in), (0, 0)))
        x_arrays = [xeo]

    params = [s1, h1, w1f, s2, h2, w2f, bf] + extra

    def run(fast):
        if stride == 1:
            x_specs = [pl.BlockSpec((c_in_p, b_tile * L), lambda i: (0, i))]
        else:
            x_specs = [pl.BlockSpec((2, c_in_p, b_tile * l_out), lambda i: (0, 0, i))]

        def const_spec(shape):
            if fast:
                # Constant-index operands: single-buffer them (free VMEM headroom,
                # matters most under v7x's 64 MiB physical VMEM).
                return pl.BlockSpec(shape, lambda i: (0,) * len(shape),
                                    pipeline_mode=pl.Buffered(1))
            return pl.BlockSpec(shape, lambda i: (0,) * len(shape))

        const_specs = [const_spec(a.shape) for a in params]
        kernel = functools.partial(_resblock_kernel, stride=stride, l_out=l_out,
                                   identity=identity, use_roll=fast)
        return pl.pallas_call(
            kernel,
            grid=grid,
            in_specs=x_specs + const_specs,
            out_specs=pl.BlockSpec((c_out_p, b_tile * l_out), lambda i: (0, i)),
            out_shape=jax.ShapeDtypeStruct((c_out_p, n * l_out), act_dtype),
            scratch_shapes=[pltpu.VMEM((3 * c_max_p, b_tile * l_out), act_dtype)],
            compiler_params=pltpu.CompilerParams(
                dimension_semantics=("parallel",),
                vmem_limit_bytes=vmem_limit),
        )(*x_arrays, *params)

    try:
        out_flat = run(True)
    except Exception:
        # Fallback for Pallas/Mosaic versions without pl.Buffered(1) single-buffering
        # or lane-rotate lowering at this tile width (concat shifts, default buffers).
        out_flat = run(False)

    out = out_flat[:c_out].reshape(c_out, n, l_out)
    return jnp.transpose(out, (1, 0, 2))


def init_params(key, c_in, c_out, downsample):
    ks = jax.random.split(key, 16)
    p = {
        "g1": 1.0 + 0.1 * jax.random.normal(ks[0], (c_in,), jnp.float32),
        "be1": 0.1 * jax.random.normal(ks[1], (c_in,), jnp.float32),
        "m1": 0.1 * jax.random.normal(ks[2], (c_in,), jnp.float32),
        "v1": 0.5 + jax.random.uniform(ks[3], (c_in,), jnp.float32),
        "w1": 0.3 * jax.random.normal(ks[4], (c_out, c_in, 3), jnp.float32),
        "b1": 0.1 * jax.random.normal(ks[5], (c_out,), jnp.float32),
        "g2": 1.0 + 0.1 * jax.random.normal(ks[6], (c_out,), jnp.float32),
        "be2": 0.1 * jax.random.normal(ks[7], (c_out,), jnp.float32),
        "m2": 0.1 * jax.random.normal(ks[8], (c_out,), jnp.float32),
        "v2": 0.5 + jax.random.uniform(ks[9], (c_out,), jnp.float32),
        "w2": 0.3 * jax.random.normal(ks[10], (c_out, c_out, 3), jnp.float32),
        "b2": 0.1 * jax.random.normal(ks[11], (c_out,), jnp.float32),
    }
    if downsample:
        p["stride"], p["identity"] = 2, False
        p["wd"] = 0.3 * jax.random.normal(ks[12], (c_out, c_in, 1), jnp.float32)
        p["bd"] = 0.1 * jax.random.normal(ks[13], (c_out,), jnp.float32)
    elif c_in == c_out:
        p["stride"], p["identity"] = 1, True
        p["wd"], p["bd"] = None, None
    else:
        p["stride"], p["identity"] = 1, False
        p["wd"] = 0.3 * jax.random.normal(ks[12], (c_out, c_in, 1), jnp.float32)
        p["bd"] = 0.1 * jax.random.normal(ks[13], (c_out,), jnp.float32)
    return p


def reference_forward(x, p):
    """Pure-JAX reference mirroring the PyTorch forward (eval mode)."""
    def bn(v, g, b, m, var):
        return (g[None, :, None] * (v - m[None, :, None])
                / jnp.sqrt(var[None, :, None] + _BN_EPS) + b[None, :, None])

    def conv1d(v, w, b, stride, pad):
        y = lax.conv_general_dilated(v, w, (stride,), [(pad, pad)],
                                     dimension_numbers=("NCH", "OIH", "NCH"))
        return y + b[None, :, None]

    y = jax.nn.relu(bn(x, p["g1"], p["be1"], p["m1"], p["v1"]))
    y = conv1d(y, p["w1"], p["b1"], p["stride"], 1)
    y = jax.nn.relu(bn(y, p["g2"], p["be2"], p["m2"], p["v2"]))
    y = conv1d(y, p["w2"], p["b2"], 1, 1)
    res = x if p["identity"] else conv1d(x, p["wd"], p["bd"], p["stride"], 0)
    return y + res


if __name__ == "__main__":
    key = jax.random.PRNGKey(0)
    kx, kp1, kp2, kp3 = jax.random.split(key, 4)

    N, C_in, C_out, L = 2, 4, 8, 16
    x = jax.random.normal(kx, (N, C_in, L), jnp.float32)

    # Case 1: downsample=True (stride-2 convs + strided 1x1-conv residual)
    p1 = init_params(kp1, C_in, C_out, downsample=True)
    out1 = residual_block_forward(x, p1)
    jax.block_until_ready(out1)
    ref1 = reference_forward(x, p1)
    assert out1.shape == ref1.shape == (N, C_out, (L - 1) // 2 + 1)
    assert bool(jnp.allclose(out1, ref1, atol=1e-4, rtol=1e-4))

    # Case 2: in_channels == out_channels, downsample=False (Identity residual)
    p2 = init_params(kp2, C_in, C_in, downsample=False)
    out2 = residual_block_forward(x, p2)
    jax.block_until_ready(out2)
    ref2 = reference_forward(x, p2)
    assert out2.shape == ref2.shape == (N, C_in, L)
    assert bool(jnp.allclose(out2, ref2, atol=1e-4, rtol=1e-4))

    # Case 3: channel expansion without downsample (1x1-conv residual, stride 1)
    p3 = init_params(kp3, C_in, C_out, downsample=False)
    out3 = residual_block_forward(x, p3)
    jax.block_until_ready(out3)
    ref3 = reference_forward(x, p3)
    assert out3.shape == ref3.shape == (N, C_out, L)
    assert bool(jnp.allclose(out3, ref3, atol=1e-4, rtol=1e-4))

    # Case 4: bf16 activation/weight carry (v6e/v7x roofline option), f32 accumulation.
    out4 = residual_block_forward(x, p1, act_dtype=jnp.bfloat16)
    jax.block_until_ready(out4)
    assert out4.shape == ref1.shape
    assert bool(jnp.allclose(out4.astype(jnp.float32), ref1, atol=0.25, rtol=0.05))

    print("KERNEL_OK")
</pallas_src>

<mosaic_0001>
module attributes {stable_mosaic.version = 11 : i64} {
  func.func @_resblock_kernel(%arg0: i32, %arg1: memref<2x8x16xf32, #tpu.memory_space<vmem>>, %arg2: memref<8x1xf32, #tpu.memory_space<vmem>>, %arg3: memref<8x1xf32, #tpu.memory_space<vmem>>, %arg4: memref<8x24xf32, #tpu.memory_space<vmem>>, %arg5: memref<8x1xf32, #tpu.memory_space<vmem>>, %arg6: memref<8x1xf32, #tpu.memory_space<vmem>>, %arg7: memref<8x24xf32, #tpu.memory_space<vmem>>, %arg8: memref<8x1xf32, #tpu.memory_space<vmem>>, %arg9: memref<8x8xf32, #tpu.memory_space<vmem>>, %arg10: memref<8x16xf32, #tpu.memory_space<vmem>>, %arg11: memref<24x16xf32, #tpu.memory_space<vmem>>) attributes {dimension_semantics = [#tpu.dimension_semantics<parallel>], iteration_bounds = array<i64: 1>, scalar_prefetch = 0 : i64, scratch_operands = 1 : i64, tpu.core_type = #tpu.core_type<tc>, window_params = [{transform_indices = @transform_0, window_bounds = array<i64: 2, 8, 16>}, {pipeline_mode = #tpu.pipeline_mode<synchronous>, transform_indices = @transform_1, window_bounds = array<i64: 8, 1>}, {pipeline_mode = #tpu.pipeline_mode<synchronous>, transform_indices = @transform_2, window_bounds = array<i64: 8, 1>}, {pipeline_mode = #tpu.pipeline_mode<synchronous>, transform_indices = @transform_3, window_bounds = array<i64: 8, 24>}, {pipeline_mode = #tpu.pipeline_mode<synchronous>, transform_indices = @transform_4, window_bounds = array<i64: 8, 1>}, {pipeline_mode = #tpu.pipeline_mode<synchronous>, transform_indices = @transform_5, window_bounds = array<i64: 8, 1>}, {pipeline_mode = #tpu.pipeline_mode<synchronous>, transform_indices = @transform_6, window_bounds = array<i64: 8, 24>}, {pipeline_mode = #tpu.pipeline_mode<synchronous>, transform_indices = @transform_7, window_bounds = array<i64: 8, 1>}, {pipeline_mode = #tpu.pipeline_mode<synchronous>, transform_indices = @transform_8, window_bounds = array<i64: 8, 8>}, {transform_indices = @transform_9, window_bounds = array<i64: 8, 16>}]} {
    %0 = tpu.iota {dimensions = array<i32: 1>} : vector<1x16xi32>
    %c8_i32 = arith.constant 8 : i32
    %c0_i32 = arith.constant 0 : i32
    %1 = arith.cmpi eq, %c8_i32, %c0_i32 : i32
    %c1_i32 = arith.constant 1 : i32
    %2 = arith.select %1, %c1_i32, %c8_i32 : i32
    %3 = vector.broadcast %2 : i32 to vector<1x16xi32>
    %4 = arith.remsi %0, %3 : vector<1x16xi32>
    %c0_i32_0 = arith.constant 0 : i32
    %5 = vector.broadcast %c0_i32_0 : i32 to vector<1x16xi32>
    %6 = arith.cmpi ne, %4, %5 : vector<1x16xi32>
    %c0_i32_1 = arith.constant 0 : i32
    %7 = vector.broadcast %c0_i32_1 : i32 to vector<1x16xi32>
    %8 = arith.cmpi slt, %4, %7 : vector<1x16xi32>
    %c0_i32_2 = arith.constant 0 : i32
    %9 = arith.cmpi slt, %2, %c0_i32_2 : i32
    %10 = vector.broadcast %9 : i1 to vector<1x16xi1>
    %11 = vector.broadcast %10 : vector<1x16xi1> to vector<1x16xi1>
    %12 = arith.xori %8, %11 : vector<1x16xi1>
    %13 = arith.andi %12, %6 : vector<1x16xi1>
    %14 = vector.broadcast %2 : i32 to vector<1x16xi32>
    %15 = arith.addi %4, %14 : vector<1x16xi32>
    %16 = arith.select %13, %15, %4 : vector<1x16xi1>, vector<1x16xi32>
    %c0_i32_3 = arith.constant 0 : i32
    %17 = vector.broadcast %c0_i32_3 : i32 to vector<1x16xi32>
    %18 = arith.cmpi eq, %16, %17 : vector<1x16xi32>
    %c7_i32 = arith.constant 7 : i32
    %19 = vector.broadcast %c7_i32 : i32 to vector<1x16xi32>
    %20 = arith.cmpi eq, %16, %19 : vector<1x16xi32>
    %c0 = arith.constant 0 : index
    %c0_4 = arith.constant 0 : index
    %21 = vector.load %arg2[%c0, %c0_4] : memref<8x1xf32, #tpu.memory_space<vmem>>, vector<8x1xf32>
    %c0_5 = arith.constant 0 : index
    %c0_6 = arith.constant 0 : index
    %22 = vector.load %arg3[%c0_5, %c0_6] : memref<8x1xf32, #tpu.memory_space<vmem>>, vector<8x1xf32>
    %c0_7 = arith.constant 0 : index
    %c0_8 = arith.constant 0 : index
    %c0_9 = arith.constant 0 : index
    %23 = vector.load %arg1[%c0_7, %c0_8, %c0_9] : memref<2x8x16xf32, #tpu.memory_space<vmem>>, vector<1x8x16xf32>
    %24 = vector.shape_cast %23 : vector<1x8x16xf32> to vector<8x16xf32>
    %25 = vector.broadcast %21 : vector<8x1xf32> to vector<8x16xf32>
    %26 = arith.mulf %24, %25 : vector<8x16xf32>
    %27 = vector.broadcast %22 : vector<8x1xf32> to vector<8x16xf32>
    %28 = arith.addf %26, %27 : vector<8x16xf32>
    %cst = arith.constant 0.000000e+00 : f32
    %29 = vector.broadcast %cst : f32 to vector<8x16xf32>
    %30 = arith.maximumf %28, %29 : vector<8x16xf32>
    %c1 = arith.constant 1 : index
    %c0_10 = arith.constant 0 : index
    %c0_11 = arith.constant 0 : index
    %31 = vector.load %arg1[%c1, %c0_10, %c0_11] : memref<2x8x16xf32, #tpu.memory_space<vmem>>, vector<1x8x16xf32>
    %32 = vector.shape_cast %31 : vector<1x8x16xf32> to vector<8x16xf32>
    %33 = vector.broadcast %21 : vector<8x1xf32> to vector<8x16xf32>
    %34 = arith.mulf %32, %33 : vector<8x16xf32>
    %35 = vector.broadcast %22 : vector<8x1xf32> to vector<8x16xf32>
    %36 = arith.addf %34, %35 : vector<8x16xf32>
    %cst_12 = arith.constant 0.000000e+00 : f32
    %37 = vector.broadcast %cst_12 : f32 to vector<8x16xf32>
    %38 = arith.maximumf %36, %37 : vector<8x16xf32>
    %c1_i32_13 = arith.constant 1 : i32
    %39 = tpu.dynamic_rotate %38 by %c1_i32_13 dim 1 : vector<8x16xf32>, i32 -> vector<8x16xf32>
    %c0_i32_14 = arith.constant 0 : i32
    %40 = arith.sitofp %c0_i32_14 : i32 to f32
    %41 = vector.shape_cast %18 : vector<1x16xi1> to vector<1x16xi1>
    %42 = vector.broadcast %41 : vector<1x16xi1> to vector<8x16xi1>
    %43 = vector.broadcast %40 : f32 to vector<8x16xf32>
    %44 = arith.select %42, %43, %39 : vector<8x16xi1>, vector<8x16xf32>
    %c0_15 = arith.constant 0 : index
    %c0_16 = arith.constant 0 : index
    %45 = vector.load %arg11[%c0_15, %c0_16] : memref<24x16xf32, #tpu.memory_space<vmem>>, vector<8x16xf32>
    tpu.vector_store %arg11[%c0_15, %c0_16], %44 {strides = array<i32>} : memref<24x16xf32, #tpu.memory_space<vmem>>, vector<8x16xf32>,
    %c8 = arith.constant 8 : index
    %c0_17 = arith.constant 0 : index
    %46 = vector.load %arg11[%c8, %c0_17] : memref<24x16xf32, #tpu.memory_space<vmem>>, vector<8x16xf32>
    tpu.vector_store %arg11[%c8, %c0_17], %30 {strides = array<i32>} : memref<24x16xf32, #tpu.memory_space<vmem>>, vector<8x16xf32>,
    %c16 = arith.constant 16 : index
    %c0_18 = arith.constant 0 : index
    %47 = vector.load %arg11[%c16, %c0_18] : memref<24x16xf32, #tpu.memory_space<vmem>>, vector<8x16xf32>
    tpu.vector_store %arg11[%c16, %c0_18], %38 {strides = array<i32>} : memref<24x16xf32, #tpu.memory_space<vmem>>, vector<8x16xf32>,
    %c0_19 = arith.constant 0 : index
    %c0_20 = arith.constant 0 : index
    %48 = vector.load %arg4[%c0_19, %c0_20] : memref<8x24xf32, #tpu.memory_space<vmem>>, vector<8x24xf32>
    %c0_21 = arith.constant 0 : index
    %c0_22 = arith.constant 0 : index
    %49 = vector.load %arg11[%c0_21, %c0_22] : memref<24x16xf32, #tpu.memory_space<vmem>>, vector<24x16xf32>
    %cst_23 = arith.constant dense<0.000000e+00> : vector<8x16xf32>
    %50 = tpu.matmul %48, %49, %cst_23 {dimension_numbers = #tpu.dot_dimension_numbers<[1], [0], [0], [1], [0, 0, 1, 1], [], []>} : vector<8x24xf32>, vector<24x16xf32>, vector<8x16xf32> -> vector<8x16xf32>
    %c0_24 = arith.constant 0 : index
    %c0_25 = arith.constant 0 : index
    %51 = vector.load %arg5[%c0_24, %c0_25] : memref<8x1xf32, #tpu.memory_space<vmem>>, vector<8x1xf32>
    %52 = vector.broadcast %51 : vector<8x1xf32> to vector<8x16xf32>
    %53 = arith.mulf %50, %52 : vector<8x16xf32>
    %c0_26 = arith.constant 0 : index
    %c0_27 = arith.constant 0 : index
    %54 = vector.load %arg6[%c0_26, %c0_27] : memref<8x1xf32, #tpu.memory_space<vmem>>, vector<8x1xf32>
    %55 = vector.broadcast %54 : vector<8x1xf32> to vector<8x16xf32>
    %56 = arith.addf %53, %55 : vector<8x16xf32>
    %cst_28 = arith.constant 0.000000e+00 : f32
    %57 = vector.broadcast %cst_28 : f32 to vector<8x16xf32>
    %58 = arith.maximumf %56, %57 : vector<8x16xf32>
    %c1_i32_29 = arith.constant 1 : i32
    %59 = tpu.dynamic_rotate %58 by %c1_i32_29 dim 1 : vector<8x16xf32>, i32 -> vector<8x16xf32>
    %c0_i32_30 = arith.constant 0 : i32
    %60 = arith.sitofp %c0_i32_30 : i32 to f32
    %61 = vector.shape_cast %18 : vector<1x16xi1> to vector<1x16xi1>
    %62 = vector.broadcast %61 : vector<1x16xi1> to vector<8x16xi1>
    %63 = vector.broadcast %60 : f32 to vector<8x16xf32>
    %64 = arith.select %62, %63, %59 : vector<8x16xi1>, vector<8x16xf32>
    %c0_31 = arith.constant 0 : index
    %c0_32 = arith.constant 0 : index
    %65 = vector.load %arg11[%c0_31, %c0_32] : memref<24x16xf32, #tpu.memory_space<vmem>>, vector<8x16xf32>
    tpu.vector_store %arg11[%c0_31, %c0_32], %64 {strides = array<i32>} : memref<24x16xf32, #tpu.memory_space<vmem>>, vector<8x16xf32>,
    %c8_33 = arith.constant 8 : index
    %c0_34 = arith.constant 0 : index
    %66 = vector.load %arg11[%c8_33, %c0_34] : memref<24x16xf32, #tpu.memory_space<vmem>>, vector<8x16xf32>
    tpu.vector_store %arg11[%c8_33, %c0_34], %58 {strides = array<i32>} : memref<24x16xf32, #tpu.memory_space<vmem>>, vector<8x16xf32>,
    %c15_i32 = arith.constant 15 : i32
    %67 = tpu.dynamic_rotate %58 by %c15_i32 dim 1 : vector<8x16xf32>, i32 -> vector<8x16xf32>
    %c0_i32_35 = arith.constant 0 : i32
    %68 = arith.sitofp %c0_i32_35 : i32 to f32
    %69 = vector.shape_cast %20 : vector<1x16xi1> to vector<1x16xi1>
    %70 = vector.broadcast %69 : vector<1x16xi1> to vector<8x16xi1>
    %71 = vector.broadcast %68 : f32 to vector<8x16xf32>
    %72 = arith.select %70, %71, %67 : vector<8x16xi1>, vector<8x16xf32>
    %c16_36 = arith.constant 16 : index
    %c0_37 = arith.constant 0 : index
    %73 = vector.load %arg11[%c16_36, %c0_37] : memref<24x16xf32, #tpu.memory_space<vmem>>, vector<8x16xf32>
    tpu.vector_store %arg11[%c16_36, %c0_37], %72 {strides = array<i32>} : memref<24x16xf32, #tpu.memory_space<vmem>>, vector<8x16xf32>,
    %c0_38 = arith.constant 0 : index
    %c0_39 = arith.constant 0 : index
    %74 = vector.load %arg7[%c0_38, %c0_39] : memref<8x24xf32, #tpu.memory_space<vmem>>, vector<8x24xf32>
    %c0_40 = arith.constant 0 : index
    %c0_41 = arith.constant 0 : index
    %75 = vector.load %arg11[%c0_40, %c0_41] : memref<24x16xf32, #tpu.memory_space<vmem>>, vector<24x16xf32>
    %cst_42 = arith.constant dense<0.000000e+00> : vector<8x16xf32>
    %76 = tpu.matmul %74, %75, %cst_42 {dimension_numbers = #tpu.dot_dimension_numbers<[1], [0], [0], [1], [0, 0, 1, 1], [], []>} : vector<8x24xf32>, vector<24x16xf32>, vector<8x16xf32> -> vector<8x16xf32>
    %c0_43 = arith.constant 0 : index
    %c0_44 = arith.constant 0 : index
    %77 = vector.load %arg8[%c0_43, %c0_44] : memref<8x1xf32, #tpu.memory_space<vmem>>, vector<8x1xf32>
    %78 = vector.broadcast %77 : vector<8x1xf32> to vector<8x16xf32>
    %79 = arith.addf %76, %78 : vector<8x16xf32>
    %c0_45 = arith.constant 0 : index
    %c0_46 = arith.constant 0 : index
    %c0_47 = arith.constant 0 : index
    %80 = vector.load %arg1[%c0_45, %c0_46, %c0_47] : memref<2x8x16xf32, #tpu.memory_space<vmem>>, vector<1x8x16xf32>
    %81 = vector.shape_cast %80 : vector<1x8x16xf32> to vector<8x16xf32>
    %c0_48 = arith.constant 0 : index
    %c0_49 = arith.constant 0 : index
    %82 = vector.load %arg9[%c0_48, %c0_49] : memref<8x8xf32, #tpu.memory_space<vmem>>, vector<8x8xf32>
    %cst_50 = arith.constant dense<0.000000e+00> : vector<8x16xf32>
    %83 = tpu.matmul %82, %81, %cst_50 {dimension_numbers = #tpu.dot_dimension_numbers<[1], [0], [0], [1], [0, 0, 1, 1], [], []>} : vector<8x8xf32>, vector<8x16xf32>, vector<8x16xf32> -> vector<8x16xf32>
    %84 = arith.addf %79, %83 : vector<8x16xf32>
    %c0_51 = arith.constant 0 : index
    %c0_52 = arith.constant 0 : index
    %85 = vector.load %arg10[%c0_51, %c0_52] : memref<8x16xf32, #tpu.memory_space<vmem>>, vector<8x16xf32>
    tpu.vector_store %arg10[%c0_51, %c0_52], %84 {strides = array<i32>} : memref<8x16xf32, #tpu.memory_space<vmem>>, vector<8x16xf32>,
    return
  }
  func.func @transform_0(%arg0: i32) -> (i32, i32, i32) {
    %c0_i32 = arith.constant 0 : i32
    %c0_i32_0 = arith.constant 0 : i32
    %c0_i32_1 = arith.constant 0 : i32
    return %c0_i32, %c0_i32_0, %arg0 : i32, i32, i32
  }
  func.func @transform_1(%arg0: i32) -> (i32, i32) {
    %c0_i32 = arith.constant 0 : i32
    %c0_i32_0 = arith.constant 0 : i32
    %c0_i32_1 = arith.constant 0 : i32
    return %c0_i32, %c0_i32_0 : i32, i32
  }
  func.func @transform_2(%arg0: i32) -> (i32, i32) {
    %c0_i32 = arith.constant 0 : i32
    %c0_i32_0 = arith.constant 0 : i32
    %c0_i32_1 = arith.constant 0 : i32
    return %c0_i32, %c0_i32_0 : i32, i32
  }
  func.func @transform_3(%arg0: i32) -> (i32, i32) {
    %c0_i32 = arith.constant 0 : i32
    %c0_i32_0 = arith.constant 0 : i32
    %c0_i32_1 = arith.constant 0 : i32
    return %c0_i32, %c0_i32_0 : i32, i32
  }
  func.func @transform_4(%arg0: i32) -> (i32, i32) {
    %c0_i32 = arith.constant 0 : i32
    %c0_i32_0 = arith.constant 0 : i32
    %c0_i32_1 = arith.constant 0 : i32
    return %c0_i32, %c0_i32_0 : i32, i32
  }
  func.func @transform_5(%arg0: i32) -> (i32, i32) {
    %c0_i32 = arith.constant 0 : i32
    %c0_i32_0 = arith.constant 0 : i32
    %c0_i32_1 = arith.constant 0 : i32
    return %c0_i32, %c0_i32_0 : i32, i32
  }
  func.func @transform_6(%arg0: i32) -> (i32, i32) {
    %c0_i32 = arith.constant 0 : i32
    %c0_i32_0 = arith.constant 0 : i32
    %c0_i32_1 = arith.constant 0 : i32
    return %c0_i32, %c0_i32_0 : i32, i32
  }
  func.func @transform_7(%arg0: i32) -> (i32, i32) {
    %c0_i32 = arith.constant 0 : i32
    %c0_i32_0 = arith.constant 0 : i32
    %c0_i32_1 = arith.constant 0 : i32
    return %c0_i32, %c0_i32_0 : i32, i32
  }
  func.func @transform_8(%arg0: i32) -> (i32, i32) {
    %c0_i32 = arith.constant 0 : i32
    %c0_i32_0 = arith.constant 0 : i32
    %c0_i32_1 = arith.constant 0 : i32
    return %c0_i32, %c0_i32_0 : i32, i32
  }
  func.func @transform_9(%arg0: i32) -> (i32, i32) {
    %c0_i32 = arith.constant 0 : i32
    %c0_i32_0 = arith.constant 0 : i32
    return %c0_i32, %arg0 : i32, i32
  }
}

module attributes {stable_mosaic.version = 11 : i64} {
  func.func @_resblock_kernel(%arg0: i32, %arg1: memref<2x8x16xf32, #tpu.memory_space<vmem>>, %arg2: memref<8x1xf32, #tpu.memory_space<vmem>>, %arg3: memref<8x1xf32, #tpu.memory_space<vmem>>, %arg4: memref<8x24xf32, #tpu.memory_space<vmem>>, %arg5: memref<8x1xf32, #tpu.memory_space<vmem>>, %arg6: memref<8x1xf32, #tpu.memory_space<vmem>>, %arg7: memref<8x24xf32, #tpu.memory_space<vmem>>, %arg8: memref<8x1xf32, #tpu.memory_space<vmem>>, %arg9: memref<8x8xf32, #tpu.memory_space<vmem>>, %arg10: memref<8x16xf32, #tpu.memory_space<vmem>>, %arg11: memref<24x16xf32, #tpu.memory_space<vmem>>) attributes {dimension_semantics = [#tpu.dimension_semantics<parallel>], iteration_bounds = array<i64: 1>, scalar_prefetch = 0 : i64, scratch_operands = 1 : i64, tpu.core_type = #tpu.core_type<tc>, window_params = [{transform_indices = @transform_0, window_bounds = array<i64: 2, 8, 16>}, {pipeline_mode = #tpu.pipeline_mode<synchronous>, transform_indices = @transform_1, window_bounds = array<i64: 8, 1>}, {pipeline_mode = #tpu.pipeline_mode<synchronous>, transform_indices = @transform_2, window_bounds = array<i64: 8, 1>}, {pipeline_mode = #tpu.pipeline_mode<synchronous>, transform_indices = @transform_3, window_bounds = array<i64: 8, 24>}, {pipeline_mode = #tpu.pipeline_mode<synchronous>, transform_indices = @transform_4, window_bounds = array<i64: 8, 1>}, {pipeline_mode = #tpu.pipeline_mode<synchronous>, transform_indices = @transform_5, window_bounds = array<i64: 8, 1>}, {pipeline_mode = #tpu.pipeline_mode<synchronous>, transform_indices = @transform_6, window_bounds = array<i64: 8, 24>}, {pipeline_mode = #tpu.pipeline_mode<synchronous>, transform_indices = @transform_7, window_bounds = array<i64: 8, 1>}, {pipeline_mode = #tpu.pipeline_mode<synchronous>, transform_indices = @transform_8, window_bounds = array<i64: 8, 8>}, {transform_indices = @transform_9, window_bounds = array<i64: 8, 16>}]} {
    %0 = tpu.iota {dimensions = array<i32: 1>} : vector<1x16xi32>
    %c8_i32 = arith.constant 8 : i32
    %c0_i32 = arith.constant 0 : i32
    %1 = arith.cmpi eq, %c8_i32, %c0_i32 : i32
    %c1_i32 = arith.constant 1 : i32
    %2 = arith.select %1, %c1_i32, %c8_i32 : i32
    %3 = vector.broadcast %2 : i32 to vector<1x16xi32>
    %4 = arith.remsi %0, %3 : vector<1x16xi32>
    %c0_i32_0 = arith.constant 0 : i32
    %5 = vector.broadcast %c0_i32_0 : i32 to vector<1x16xi32>
    %6 = arith.cmpi ne, %4, %5 : vector<1x16xi32>
    %c0_i32_1 = arith.constant 0 : i32
    %7 = vector.broadcast %c0_i32_1 : i32 to vector<1x16xi32>
    %8 = arith.cmpi slt, %4, %7 : vector<1x16xi32>
    %c0_i32_2 = arith.constant 0 : i32
    %9 = arith.cmpi slt, %2, %c0_i32_2 : i32
    %10 = vector.broadcast %9 : i1 to vector<1x16xi1>
    %11 = vector.broadcast %10 : vector<1x16xi1> to vector<1x16xi1>
    %12 = arith.xori %8, %11 : vector<1x16xi1>
    %13 = arith.andi %12, %6 : vector<1x16xi1>
    %14 = vector.broadcast %2 : i32 to vector<1x16xi32>
    %15 = arith.addi %4, %14 : vector<1x16xi32>
    %16 = arith.select %13, %15, %4 : vector<1x16xi1>, vector<1x16xi32>
    %c0_i32_3 = arith.constant 0 : i32
    %17 = vector.broadcast %c0_i32_3 : i32 to vector<1x16xi32>
    %18 = arith.cmpi eq, %16, %17 : vector<1x16xi32>
    %c7_i32 = arith.constant 7 : i32
    %19 = vector.broadcast %c7_i32 : i32 to vector<1x16xi32>
    %20 = arith.cmpi eq, %16, %19 : vector<1x16xi32>
    %c0 = arith.constant 0 : index
    %c0_4 = arith.constant 0 : index
    %21 = vector.load %arg2[%c0, %c0_4] : memref<8x1xf32, #tpu.memory_space<vmem>>, vector<8x1xf32>
    %c0_5 = arith.constant 0 : index
    %c0_6 = arith.constant 0 : index
    %22 = vector.load %arg3[%c0_5, %c0_6] : memref<8x1xf32, #tpu.memory_space<vmem>>, vector<8x1xf32>
    %c0_7 = arith.constant 0 : index
    %c0_8 = arith.constant 0 : index
    %c0_9 = arith.constant 0 : index
    %23 = vector.load %arg1[%c0_7, %c0_8, %c0_9] : memref<2x8x16xf32, #tpu.memory_space<vmem>>, vector<1x8x16xf32>
    %24 = vector.shape_cast %23 : vector<1x8x16xf32> to vector<8x16xf32>
    %25 = vector.broadcast %21 : vector<8x1xf32> to vector<8x16xf32>
    %26 = arith.mulf %24, %25 : vector<8x16xf32>
    %27 = vector.broadcast %22 : vector<8x1xf32> to vector<8x16xf32>
    %28 = arith.addf %26, %27 : vector<8x16xf32>
    %cst = arith.constant 0.000000e+00 : f32
    %29 = vector.broadcast %cst : f32 to vector<8x16xf32>
    %30 = arith.maximumf %28, %29 : vector<8x16xf32>
    %c1 = arith.constant 1 : index
    %c0_10 = arith.constant 0 : index
    %c0_11 = arith.constant 0 : index
    %31 = vector.load %arg1[%c1, %c0_10, %c0_11] : memref<2x8x16xf32, #tpu.memory_space<vmem>>, vector<1x8x16xf32>
    %32 = vector.shape_cast %31 : vector<1x8x16xf32> to vector<8x16xf32>
    %33 = vector.broadcast %21 : vector<8x1xf32> to vector<8x16xf32>
    %34 = arith.mulf %32, %33 : vector<8x16xf32>
    %35 = vector.broadcast %22 : vector<8x1xf32> to vector<8x16xf32>
    %36 = arith.addf %34, %35 : vector<8x16xf32>
    %cst_12 = arith.constant 0.000000e+00 : f32
    %37 = vector.broadcast %cst_12 : f32 to vector<8x16xf32>
    %38 = arith.maximumf %36, %37 : vector<8x16xf32>
    %cst_13 = arith.constant 0.000000e+00 : f32
    %39 = vector.broadcast %cst_13 : f32 to vector<8x1xf32>
    %40 = vector.extract_strided_slice %38 {offsets = [0, 0], sizes = [8, 15], strides = [1, 1]} : vector<8x16xf32> to vector<8x15xf32>
    %41 = tpu.concatenate %39, %40 in 1 : vector<8x1xf32>, vector<8x15xf32> -> vector<8x16xf32>
    %c0_i32_14 = arith.constant 0 : i32
    %42 = arith.sitofp %c0_i32_14 : i32 to f32
    %43 = vector.shape_cast %18 : vector<1x16xi1> to vector<1x16xi1>
    %44 = vector.broadcast %43 : vector<1x16xi1> to vector<8x16xi1>
    %45 = vector.broadcast %42 : f32 to vector<8x16xf32>
    %46 = arith.select %44, %45, %41 : vector<8x16xi1>, vector<8x16xf32>
    %c0_15 = arith.constant 0 : index
    %c0_16 = arith.constant 0 : index
    %47 = vector.load %arg11[%c0_15, %c0_16] : memref<24x16xf32, #tpu.memory_space<vmem>>, vector<8x16xf32>
    tpu.vector_store %arg11[%c0_15, %c0_16], %46 {strides = array<i32>} : memref<24x16xf32, #tpu.memory_space<vmem>>, vector<8x16xf32>,
    %c8 = arith.constant 8 : index
    %c0_17 = arith.constant 0 : index
    %48 = vector.load %arg11[%c8, %c0_17] : memref<24x16xf32, #tpu.memory_space<vmem>>, vector<8x16xf32>
    tpu.vector_store %arg11[%c8, %c0_17], %30 {strides = array<i32>} : memref<24x16xf32, #tpu.memory_space<vmem>>, vector<8x16xf32>,
    %c16 = arith.constant 16 : index
    %c0_18 = arith.constant 0 : index
    %49 = vector.load %arg11[%c16, %c0_18] : memref<24x16xf32, #tpu.memory_space<vmem>>, vector<8x16xf32>
    tpu.vector_store %arg11[%c16, %c0_18], %38 {strides = array<i32>} : memref<24x16xf32, #tpu.memory_space<vmem>>, vector<8x16xf32>,
    %c0_19 = arith.constant 0 : index
    %c0_20 = arith.constant 0 : index
    %50 = vector.load %arg4[%c0_19, %c0_20] : memref<8x24xf32, #tpu.memory_space<vmem>>, vector<8x24xf32>
    %c0_21 = arith.constant 0 : index
    %c0_22 = arith.constant 0 : index
    %51 = vector.load %arg11[%c0_21, %c0_22] : memref<24x16xf32, #tpu.memory_space<vmem>>, vector<24x16xf32>
    %cst_23 = arith.constant dense<0.000000e+00> : vector<8x16xf32>
    %52 = tpu.matmul %50, %51, %cst_23 {dimension_numbers = #tpu.dot_dimension_numbers<[1], [0], [0], [1], [0, 0, 1, 1], [], []>} : vector<8x24xf32>, vector<24x16xf32>, vector<8x16xf32> -> vector<8x16xf32>
    %c0_24 = arith.constant 0 : index
    %c0_25 = arith.constant 0 : index
    %53 = vector.load %arg5[%c0_24, %c0_25] : memref<8x1xf32, #tpu.memory_space<vmem>>, vector<8x1xf32>
    %54 = vector.broadcast %53 : vector<8x1xf32> to vector<8x16xf32>
    %55 = arith.mulf %52, %54 : vector<8x16xf32>
    %c0_26 = arith.constant 0 : index
    %c0_27 = arith.constant 0 : index
    %56 = vector.load %arg6[%c0_26, %c0_27] : memref<8x1xf32, #tpu.memory_space<vmem>>, vector<8x1xf32>
    %57 = vector.broadcast %56 : vector<8x1xf32> to vector<8x16xf32>
    %58 = arith.addf %55, %57 : vector<8x16xf32>
    %cst_28 = arith.constant 0.000000e+00 : f32
    %59 = vector.broadcast %cst_28 : f32 to vector<8x16xf32>
    %60 = arith.maximumf %58, %59 : vector<8x16xf32>
    %cst_29 = arith.constant 0.000000e+00 : f32
    %61 = vector.broadcast %cst_29 : f32 to vector<8x1xf32>
    %62 = vector.extract_strided_slice %60 {offsets = [0, 0], sizes = [8, 15], strides = [1, 1]} : vector<8x16xf32> to vector<8x15xf32>
    %63 = tpu.concatenate %61, %62 in 1 : vector<8x1xf32>, vector<8x15xf32> -> vector<8x16xf32>
    %c0_i32_30 = arith.constant 0 : i32
    %64 = arith.sitofp %c0_i32_30 : i32 to f32
    %65 = vector.shape_cast %18 : vector<1x16xi1> to vector<1x16xi1>
    %66 = vector.broadcast %65 : vector<1x16xi1> to vector<8x16xi1>
    %67 = vector.broadcast %64 : f32 to vector<8x16xf32>
    %68 = arith.select %66, %67, %63 : vector<8x16xi1>, vector<8x16xf32>
    %c0_31 = arith.constant 0 : index
    %c0_32 = arith.constant 0 : index
    %69 = vector.load %arg11[%c0_31, %c0_32] : memref<24x16xf32, #tpu.memory_space<vmem>>, vector<8x16xf32>
    tpu.vector_store %arg11[%c0_31, %c0_32], %68 {strides = array<i32>} : memref<24x16xf32, #tpu.memory_space<vmem>>, vector<8x16xf32>,
    %c8_33 = arith.constant 8 : index
    %c0_34 = arith.constant 0 : index
    %70 = vector.load %arg11[%c8_33, %c0_34] : memref<24x16xf32, #tpu.memory_space<vmem>>, vector<8x16xf32>
    tpu.vector_store %arg11[%c8_33, %c0_34], %60 {strides = array<i32>} : memref<24x16xf32, #tpu.memory_space<vmem>>, vector<8x16xf32>,
    %cst_35 = arith.constant 0.000000e+00 : f32
    %71 = vector.broadcast %cst_35 : f32 to vector<8x1xf32>
    %72 = vector.extract_strided_slice %60 {offsets = [0, 1], sizes = [8, 15], strides = [1, 1]} : vector<8x16xf32> to vector<8x15xf32>
    %73 = tpu.concatenate %72, %71 in 1 : vector<8x15xf32>, vector<8x1xf32> -> vector<8x16xf32>
    %c0_i32_36 = arith.constant 0 : i32
    %74 = arith.sitofp %c0_i32_36 : i32 to f32
    %75 = vector.shape_cast %20 : vector<1x16xi1> to vector<1x16xi1>
    %76 = vector.broadcast %75 : vector<1x16xi1> to vector<8x16xi1>
    %77 = vector.broadcast %74 : f32 to vector<8x16xf32>
    %78 = arith.select %76, %77, %73 : vector<8x16xi1>, vector<8x16xf32>
    %c16_37 = arith.constant 16 : index
    %c0_38 = arith.constant 0 : index
    %79 = vector.load %arg11[%c16_37, %c0_38] : memref<24x16xf32, #tpu.memory_space<vmem>>, vector<8x16xf32>
    tpu.vector_store %arg11[%c16_37, %c0_38], %78 {strides = array<i32>} : memref<24x16xf32, #tpu.memory_space<vmem>>, vector<8x16xf32>,
    %c0_39 = arith.constant 0 : index
    %c0_40 = arith.constant 0 : index
    %80 = vector.load %arg7[%c0_39, %c0_40] : memref<8x24xf32, #tpu.memory_space<vmem>>, vector<8x24xf32>
    %c0_41 = arith.constant 0 : index
    %c0_42 = arith.constant 0 : index
    %81 = vector.load %arg11[%c0_41, %c0_42] : memref<24x16xf32, #tpu.memory_space<vmem>>, vector<24x16xf32>
    %cst_43 = arith.constant dense<0.000000e+00> : vector<8x16xf32>
    %82 = tpu.matmul %80, %81, %cst_43 {dimension_numbers = #tpu.dot_dimension_numbers<[1], [0], [0], [1], [0, 0, 1, 1], [], []>} : vector<8x24xf32>, vector<24x16xf32>, vector<8x16xf32> -> vector<8x16xf32>
    %c0_44 = arith.constant 0 : index
    %c0_45 = arith.constant 0 : index
    %83 = vector.load %arg8[%c0_44, %c0_45] : memref<8x1xf32, #tpu.memory_space<vmem>>, vector<8x1xf32>
    %84 = vector.broadcast %83 : vector<8x1xf32> to vector<8x16xf32>
    %85 = arith.addf %82, %84 : vector<8x16xf32>
    %c0_46 = arith.constant 0 : index
    %c0_47 = arith.constant 0 : index
    %c0_48 = arith.constant 0 : index
    %86 = vector.load %arg1[%c0_46, %c0_47, %c0_48] : memref<2x8x16xf32, #tpu.memory_space<vmem>>, vector<1x8x16xf32>
    %87 = vector.shape_cast %86 : vector<1x8x16xf32> to vector<8x16xf32>
    %c0_49 = arith.constant 0 : index
    %c0_50 = arith.constant 0 : index
    %88 = vector.load %arg9[%c0_49, %c0_50] : memref<8x8xf32, #tpu.memory_space<vmem>>, vector<8x8xf32>
    %cst_51 = arith.constant dense<0.000000e+00> : vector<8x16xf32>
    %89 = tpu.matmul %88, %87, %cst_51 {dimension_numbers = #tpu.dot_dimension_numbers<[1], [0], [0], [1], [0, 0, 1, 1], [], []>} : vector<8x8xf32>, vector<8x16xf32>, vector<8x16xf32> -> vector<8x16xf32>
    %90 = arith.addf %85, %89 : vector<8x16xf32>
    %c0_52 = arith.constant 0 : index
    %c0_53 = arith.constant 0 : index
    %91 = vector.load %arg10[%c0_52, %c0_53] : memref<8x16xf32, #tpu.memory_space<vmem>>, vector<8x16xf32>
    tpu.vector_store %arg10[%c0_52, %c0_53], %90 {strides = array<i32>} : memref<8x16xf32, #tpu.memory_space<vmem>>, vector<8x16xf32>,
    return
  }
  func.func @transform_0(%arg0: i32) -> (i32, i32, i32) {
    %c0_i32 = arith.constant 0 : i32
    %c0_i32_0 = arith.constant 0 : i32
    %c0_i32_1 = arith.constant 0 : i32
    return %c0_i32, %c0_i32_0, %arg0 : i32, i32, i32
  }
  func.func @transform_1(%arg0: i32) -> (i32, i32) {
    %c0_i32 = arith.constant 0 : i32
    %c0_i32_0 = arith.constant 0 : i32
    %c0_i32_1 = arith.constant 0 : i32
    return %c0_i32, %c0_i32_0 : i32, i32
  }
  func.func @transform_2(%arg0: i32) -> (i32, i32) {
    %c0_i32 = arith.constant 0 : i32
    %c0_i32_0 = arith.constant 0 : i32
    %c0_i32_1 = arith.constant 0 : i32
    return %c0_i32, %c0_i32_0 : i32, i32
  }
  func.func @transform_3(%arg0: i32) -> (i32, i32) {
    %c0_i32 = arith.constant 0 : i32
    %c0_i32_0 = arith.constant 0 : i32
    %c0_i32_1 = arith.constant 0 : i32
    return %c0_i32, %c0_i32_0 : i32, i32
  }
  func.func @transform_4(%arg0: i32) -> (i32, i32) {
    %c0_i32 = arith.constant 0 : i32
    %c0_i32_0 = arith.constant 0 : i32
    %c0_i32_1 = arith.constant 0 : i32
    return %c0_i32, %c0_i32_0 : i32, i32
  }
  func.func @transform_5(%arg0: i32) -> (i32, i32) {
    %c0_i32 = arith.constant 0 : i32
    %c0_i32_0 = arith.constant 0 : i32
    %c0_i32_1 = arith.constant 0 : i32
    return %c0_i32, %c0_i32_0 : i32, i32
  }
  func.func @transform_6(%arg0: i32) -> (i32, i32) {
    %c0_i32 = arith.constant 0 : i32
    %c0_i32_0 = arith.constant 0 : i32
    %c0_i32_1 = arith.constant 0 : i32
    return %c0_i32, %c0_i32_0 : i32, i32
  }
  func.func @transform_7(%arg0: i32) -> (i32, i32) {
    %c0_i32 = arith.constant 0 : i32
    %c0_i32_0 = arith.constant 0 : i32
    %c0_i32_1 = arith.constant 0 : i32
    return %c0_i32, %c0_i32_0 : i32, i32
  }
  func.func @transform_8(%arg0: i32) -> (i32, i32) {
    %c0_i32 = arith.constant 0 : i32
    %c0_i32_0 = arith.constant 0 : i32
    %c0_i32_1 = arith.constant 0 : i32
    return %c0_i32, %c0_i32_0 : i32, i32
  }
  func.func @transform_9(%arg0: i32) -> (i32, i32) {
    %c0_i32 = arith.constant 0 : i32
    %c0_i32_0 = arith.constant 0 : i32
    return %c0_i32, %arg0 : i32, i32
  }
}

</mosaic_0001>

<llo_original>
// kernel: tpu_custom_call.1
$region0: #{tpu_custom_call.1}
  #allocation0 [shape = 'u32[]', space=smem, size = 0x4, offset = 0x4, fixed_abs, tag = 'smem constant byte address 0x4 - core index']
  #allocation1 [shape = 'u32[72,128]{1,0:T(1,128)}', space=vmem, size = 0x9000, scoped, tag = 'internal scratch']
  #allocation2 [shape = 'f32[24,16]{1,0:T(8,128)}', space=vmem, size = 0x3000, scoped, tag = 'scratch operand']
  %s0 = inlined_call_operand.vmem [shape: f32[2,8,16], index: 0, kind: input, shape index: {}]
  %s1 = inlined_call_operand.vmem [shape: f32[8,1], index: 1, kind: input, shape index: {}]
  %s2 = inlined_call_operand.vmem [shape: f32[8,1], index: 2, kind: input, shape index: {}]
  %s3 = inlined_call_operand.vmem [shape: f32[8,24], index: 3, kind: input, shape index: {}]
  %s4 = inlined_call_operand.vmem [shape: f32[8,1], index: 4, kind: input, shape index: {}]
  %s5 = inlined_call_operand.vmem [shape: f32[8,1], index: 5, kind: input, shape index: {}]
  %s6 = inlined_call_operand.vmem [shape: f32[8,24], index: 6, kind: input, shape index: {}]
  %s7 = inlined_call_operand.vmem [shape: f32[8,1], index: 7, kind: input, shape index: {}]
  %s8 = inlined_call_operand.vmem [shape: f32[8,8], index: 8, kind: input, shape index: {}]
  %s9 = inlined_call_operand.hbm [shape: f32[8,16], index: 9, kind: output, shape index: {}]
  %s10 = sld [smem:[#allocation0]]
  $region46: #{tpu_custom_call.1} parent=0
    _
  %s12 = ssub.s32 1, %s10
  %s13 = scalar_select 0, %s12, %s10
  $region1: #{tpu_custom_call.1} parent=0
    #allocation3 [shape = 'u8[4096]{0}', space=vmem, size = 0x1000, scoped, tag = 'output window, operand 0, single buffered']
    #allocation4 [shape = 's32[1]{0}', space=sflag, size = 0x4, scoped, tag = 'scoped memory for tpu_custom_call.1']
    %14 = vsyncpa [#allocation4], 0
    // Predicated region
    $region2: #{tpu_custom_call.1} parent=1 // pred_check
      _
    $region3: #{tpu_custom_call.1} parent=1 // pred_check_branch
      %16 = sbr.rel (0) target = $region5
    $region4: #{tpu_custom_call.1} parent=1 // pred_region
      _
    $region5: #{tpu_custom_call.1} parent=1 // pred_fallthru
      _
    // Predicated region
    $region6: #{tpu_custom_call.1} parent=1 // pred_check
      _
    $region7: #{tpu_custom_call.1} parent=1 // pred_check_branch
      %18 = sbr.rel (0) target = $region9
    $region8: #{tpu_custom_call.1} parent=1 // pred_region
      _
    $region9: #{tpu_custom_call.1} parent=1 // pred_fallthru
      _
    // Predicated region
    $region10: #{tpu_custom_call.1} parent=1 // pred_check
      _
    $region11: #{tpu_custom_call.1} parent=1 // pred_check_branch
      %20 = sbr.rel (0) target = $region13
    $region12: #{tpu_custom_call.1} parent=1 // pred_region
      _
    $region13: #{tpu_custom_call.1} parent=1 // pred_fallthru
      _
    // Predicated region
    $region14: #{tpu_custom_call.1} parent=1 // pred_check
      _
    $region15: #{tpu_custom_call.1} parent=1 // pred_check_branch
      %22 = sbr.rel (0) target = $region17
    $region16: #{tpu_custom_call.1} parent=1 // pred_region
      _
    $region17: #{tpu_custom_call.1} parent=1 // pred_fallthru
      _
    // Predicated region
    $region18: #{tpu_custom_call.1} parent=1 // pred_check
      _
    $region19: #{tpu_custom_call.1} parent=1 // pred_check_branch
      %24 = sbr.rel (0) target = $region21
    $region20: #{tpu_custom_call.1} parent=1 // pred_region
      _
    $region21: #{tpu_custom_call.1} parent=1 // pred_fallthru
      _
    // Predicated region
    $region22: #{tpu_custom_call.1} parent=1 // pred_check
      _
    $region23: #{tpu_custom_call.1} parent=1 // pred_check_branch
      %26 = sbr.rel (0) target = $region25
    $region24: #{tpu_custom_call.1} parent=1 // pred_region
      _
    $region25: #{tpu_custom_call.1} parent=1 // pred_fallthru
      _
    // Predicated region
    $region26: #{tpu_custom_call.1} parent=1 // pred_check
      _
    $region27: #{tpu_custom_call.1} parent=1 // pred_check_branch
      %28 = sbr.rel (0) target = $region29
    $region28: #{tpu_custom_call.1} parent=1 // pred_region
      _
    $region29: #{tpu_custom_call.1} parent=1 // pred_fallthru
      _
    // Predicated region
    $region30: #{tpu_custom_call.1} parent=1 // pred_check
      _
    $region31: #{tpu_custom_call.1} parent=1 // pred_check_branch
      %30 = sbr.rel (0) target = $region33
    $region32: #{tpu_custom_call.1} parent=1 // pred_region
      _
    $region33: #{tpu_custom_call.1} parent=1 // pred_fallthru
      _
    // Predicated region
    $region34: #{tpu_custom_call.1} parent=1 // pred_check
      _
    $region35: #{tpu_custom_call.1} parent=1 // pred_check_branch
      %32 = sbr.rel (0) target = $region37
    $region36: #{tpu_custom_call.1} parent=1 // pred_region
      _
    $region37: #{tpu_custom_call.1} parent=1 // pred_fallthru
      _
    %v33 = vlaneseq
    %v34 = vand.u32 %v33, 127
    %vm35 = vcmp.lt.s32.totalorder %v34, 0
    %v36 = vsub.s32 0, %v34
    %v37 = vsel %vm35, %v36, %v34
    %v38 = vshrl.u32 %v37, 3
    %v39 = vand.u32 %v37, 7
    %v40 = vsub.s32 0, %v39
    %v41 = vsel %vm35, %v40, %v39
    %vm42 = vcmp.ne.s32.totalorder %v41, 0
    %vm43 = vcmp.lt.s32.totalorder %v41, 0
    %vm44 = vmand %vm43, %vm42
    %v45 = vadd.s32 %v41, 8
    %v46 = vsel %vm44, %v45, %v41
    %vm47 = vcmp.eq.s32.totalorder %v46, 0
    %vm48 = vcmp.eq.s32.totalorder %v46, 7
    %v49 = vld [vmem:[%s1] sm:$0xff]
    %v50 = vld [vmem:[%s2] sm:$0xff]
    %v51 = vld [vmem:[%s0] sm:$0xff]
    %53 = vset.pattern.permute.xlu0 0
    %54 = vperm.xlu0 %53, %v49
    %v55 = vpop.permute.xlu0 %54
    %v57 = vmul.f32 %v51, %v55
    %59 = vset.pattern.permute.xlu0 0
    %60 = vperm.xlu0 %59, %v50
    %v61 = vpop.permute.xlu0 %60
    %v63 = vadd.f32 %v57, %v61
    %v64 = vmax.f32 %v63, 0.0
    %s65 = scalar_lea.vmem %s0, 8
    %v66 = vld [vmem:[%s65] sm:$0xff]
    %v67 = vmul.f32 %v66, %v55
    %v68 = vadd.f32 %v67, %v61
    %v69 = vmax.f32 %v68, 0.0
    %vm70 = vcmask 1047680
    %71 = vrot.lane.b32.xlu0 %v69, 16
    %v72 = vpop.permute.xlu0 %71
    %v73 = vsel %vm70, %v72, %v69
    %74 = vrot.lane.b32.xlu0 %v73, 16
    %v75 = vpop.permute.xlu0 %74
    %v76 = vsel %vm70, %v75, %v69
    %v77 = vsel %vm47, 1, 0
    %vm78 = vcmp.eq.s32.totalorder %v77, 1
    %80 = vrot.lane.b32.xlu0 %v76, 113
    %v81 = vpop.permute.xlu0 %80
    %v83 = vsel %vm78, 0.0, %v81
    %vm84 = vcmask 130048
    %85 = vst.msk [vmem:[#allocation2] sm:$0xff] %vm84, %v83
    %86 = vst.msk [vmem:[#allocation2 + $0x8] sm:$0xff] %vm84, %v64
    %87 = vst.msk [vmem:[#allocation2 + $0x10] sm:$0xff] %vm84, %v69
    %v88 = vld [vmem:[%s3] sm:$0xff]
    %v89 = vld [vmem:[#allocation2] sm:$0xff]
    %v90 = vld [vmem:[#allocation2 + $0x8] sm:$0xff]
    %v91 = vld [vmem:[#allocation2 + $0x10] sm:$0xff]
    %vm92 = vcmask 195584
    %v94 = vsel %vm92, %v88, 0
    %96 = vmatpush.msra.mxu0 0.0
    %97 = vmatpush.msra.mxu0 0.0
    %98 = vmatpush.msra.mxu0 0.0
    %99 = vmatpush.msra.mxu0 0.0
    %100 = vmatpush.msra.mxu0 0.0
    %101 = vmatpush.msra.mxu0 0.0
    %102 = vmatpush.msra.mxu0 0.0
    %103 = vmatpush.msra.mxu0 0.0
    %104 = vmatpush.msra.mxu0 0.0
    %105 = vmatpush.msra.mxu0 0.0
    %106 = vmatpush.msra.mxu0 0.0
    %107 = vmatpush.msra.mxu0 0.0
    %108 = vmatpush.msra.mxu0 0.0
    %109 = vmatpush.msra.mxu0 %v91
    %110 = vmatpush.msra.mxu0 %v90
    %111 = vmatpush.msra.mxu0 %v89
    %112 = vmatmul.f32.gmra.mxu0 %v94
    %v113 = vpop.f32.mrf.mxu0
    %v114 = vadd.f32 0.0, %v113
    %115 = vdwg.mxu0
    %v116 = vld [vmem:[%s4] sm:$0xff]
    %118 = vset.pattern.permute.xlu0 0
    %119 = vperm.xlu0 %118, %v116
    %v120 = vpop.permute.xlu0 %119
    %v122 = vmul.f32 %v114, %v120
    %v123 = vld [vmem:[%s5] sm:$0xff]
    %125 = vset.pattern.permute.xlu0 0
    %126 = vperm.xlu0 %125, %v123
    %v127 = vpop.permute.xlu0 %126
    %v129 = vadd.f32 %v122, %v127
    %v130 = vmax.f32 %v129, 0.0
    %131 = vrot.lane.b32.xlu0 %v130, 16
    %v132 = vpop.permute.xlu0 %131
    %v133 = vsel %vm70, %v132, %v130
    %134 = vrot.lane.b32.xlu0 %v133, 16
    %v135 = vpop.permute.xlu0 %134
    %v136 = vsel %vm70, %v135, %v130
    %138 = vrot.lane.b32.xlu0 %v136, 113
    %v139 = vpop.permute.xlu0 %138
    %v141 = vsel %vm78, 0.0, %v139
    %142 = vst.msk [vmem:[#allocation2] sm:$0xff] %vm84, %v141
    %143 = vst.msk [vmem:[#allocation2 + $0x8] sm:$0xff] %vm84, %v130
    %v144 = vsel %vm48, 1, 0
    %vm145 = vcmp.eq.s32.totalorder %v144, 1
    %146 = vrot.lane.b32.xlu0 %v136, 127
    %v147 = vpop.permute.xlu0 %146
    %v149 = vsel %vm145, 0.0, %v147
    %150 = vst.msk [vmem:[#allocation2 + $0x10] sm:$0xff] %vm84, %v149
    %v151 = vld [vmem:[%s6] sm:$0xff]
    %v152 = vld [vmem:[#allocation2] sm:$0xff]
    %v153 = vld [vmem:[#allocation2 + $0x8] sm:$0xff]
    %v154 = vld [vmem:[#allocation2 + $0x10] sm:$0xff]
    %v155 = vld [vmem:[%s7] sm:$0xff]
    %157 = vset.pattern.permute.xlu0 0
    %158 = vperm.xlu0 %157, %v155
    %v159 = vpop.permute.xlu0 %158
    %v162 = vsel %vm92, %v151, 0
    %164 = vmatpush.msra.mxu0 0.0
    %165 = vmatpush.msra.mxu0 0.0
    %166 = vmatpush.msra.mxu0 0.0
    %167 = vmatpush.msra.mxu0 0.0
    %168 = vmatpush.msra.mxu0 0.0
    %169 = vmatpush.msra.mxu0 0.0
    %170 = vmatpush.msra.mxu0 0.0
    %171 = vmatpush.msra.mxu0 0.0
    %172 = vmatpush.msra.mxu0 0.0
    %173 = vmatpush.msra.mxu0 0.0
    %174 = vmatpush.msra.mxu0 0.0
    %175 = vmatpush.msra.mxu0 0.0
    %176 = vmatpush.msra.mxu0 0.0
    %177 = vmatpush.msra.mxu0 %v154
    %178 = vmatpush.msra.mxu0 %v153
    %179 = vmatpush.msra.mxu0 %v152
    %180 = vmatmul.f32.gmra.mxu0 %v162
    %v181 = vpop.f32.mrf.mxu0
    %v182 = vadd.f32 %v159, %v181
    %183 = vdwg.mxu0
    %v184 = vld [vmem:[%s0] sm:$0xff]
    %v185 = vld [vmem:[%s8] sm:$0xff]
    %vm186 = vcmask 64512
    %v188 = vsel %vm186, %v185, 0
    %190 = vmatpush.msra.mxu0 0.0
    %191 = vmatpush.msra.mxu0 0.0
    %192 = vmatpush.msra.mxu0 0.0
    %193 = vmatpush.msra.mxu0 0.0
    %194 = vmatpush.msra.mxu0 0.0
    %195 = vmatpush.msra.mxu0 0.0
    %196 = vmatpush.msra.mxu0 0.0
    %197 = vmatpush.msra.mxu0 0.0
    %198 = vmatpush.msra.mxu0 0.0
    %199 = vmatpush.msra.mxu0 0.0
    %200 = vmatpush.msra.mxu0 0.0
    %201 = vmatpush.msra.mxu0 0.0
    %202 = vmatpush.msra.mxu0 0.0
    %203 = vmatpush.msra.mxu0 0.0
    %204 = vmatpush.msra.mxu0 0.0
    %205 = vmatpush.msra.mxu0 %v184
    %206 = vmatmul.f32.gmra.mxu0 %v188
    %v207 = vpop.f32.mrf.mxu0
    %v208 = vadd.f32 0.0, %v207
    %209 = vdwg.mxu0
    %v210 = vadd.f32 %v182, %v208
    %211 = vst.msk [vmem:[#allocation3] sm:$0xff] %vm84, %v210
    // Predicated region
    $region38: #{tpu_custom_call.1} parent=1 // pred_check
      _
    $region39: #{tpu_custom_call.1} parent=1 // pred_check_branch
      %213 = sbr.rel (0) target = $region41
    $region40: #{tpu_custom_call.1} parent=1 // pred_region
      %215 = vsyncadd [#allocation4], 0
      %s217 = sshll.u32 [#allocation3], 4
      %s218 = int_to_ptr.vmem [resolvable:$true] %s217
      %s219 = sshll.u32 %s9, 4
      %s220 = int_to_ptr.hbm [resolvable:$true] %s219
      %222 = dma.vmem_to_hbm [thread:$0]  %s218, 128, %s220, [#allocation4]
    $region41: #{tpu_custom_call.1} parent=1 // pred_fallthru
      _
    // Predicated region
    $region42: #{tpu_custom_call.1} parent=1 // pred_check
      _
    $region43: #{tpu_custom_call.1} parent=1 // pred_check_branch
      %224 = sbr.rel (0) target = $region45
    $region44: #{tpu_custom_call.1} parent=1 // pred_region
      %226 = dma.done [#allocation4], 128
    $region45: #{tpu_custom_call.1} parent=1 // pred_fallthru
      _
    %227 = vsyncpa [#allocation4], 1

// kernel: tpu_custom_call.1
$region0: #{tpu_custom_call.1}
  #allocation0 [shape = 'u32[]', space=smem, size = 0x4, offset = 0x4, fixed_abs, tag = 'smem constant byte address 0x4 - core index']
  #allocation1 [shape = 'u32[72,128]{1,0:T(1,128)}', space=vmem, size = 0x9000, scoped, tag = 'internal scratch']
  #allocation2 [shape = 'f32[24,16]{1,0:T(8,128)}', space=vmem, size = 0x3000, scoped, tag = 'scratch operand']
  %s0 = inlined_call_operand.vmem [shape: f32[2,8,16], index: 0, kind: input, shape index: {}]
  %s1 = inlined_call_operand.vmem [shape: f32[8,1], index: 1, kind: input, shape index: {}]
  %s2 = inlined_call_operand.vmem [shape: f32[8,1], index: 2, kind: input, shape index: {}]
  %s3 = inlined_call_operand.vmem [shape: f32[8,24], index: 3, kind: input, shape index: {}]
  %s4 = inlined_call_operand.vmem [shape: f32[8,1], index: 4, kind: input, shape index: {}]
  %s5 = inlined_call_operand.vmem [shape: f32[8,1], index: 5, kind: input, shape index: {}]
  %s6 = inlined_call_operand.vmem [shape: f32[8,24], index: 6, kind: input, shape index: {}]
  %s7 = inlined_call_operand.vmem [shape: f32[8,1], index: 7, kind: input, shape index: {}]
  %s8 = inlined_call_operand.vmem [shape: f32[8,8], index: 8, kind: input, shape index: {}]
  %s9 = inlined_call_operand.hbm [shape: f32[8,16], index: 9, kind: output, shape index: {}]
  %s10 = sld [smem:[#allocation0]]
  $region46: #{tpu_custom_call.1} parent=0
    _
  %s12 = ssub.s32 1, %s10
  %s13 = scalar_select 0, %s12, %s10
  $region1: #{tpu_custom_call.1} parent=0
    #allocation3 [shape = 'u8[4096]{0}', space=vmem, size = 0x1000, scoped, tag = 'output window, operand 0, single buffered']
    #allocation4 [shape = 's32[1]{0}', space=sflag, size = 0x4, scoped, tag = 'scoped memory for tpu_custom_call.1']
    %14 = vsyncpa [#allocation4], 0
    // Predicated region
    $region2: #{tpu_custom_call.1} parent=1 // pred_check
      _
    $region3: #{tpu_custom_call.1} parent=1 // pred_check_branch
      %16 = sbr.rel (0) target = $region5
    $region4: #{tpu_custom_call.1} parent=1 // pred_region
      _
    $region5: #{tpu_custom_call.1} parent=1 // pred_fallthru
      _
    // Predicated region
    $region6: #{tpu_custom_call.1} parent=1 // pred_check
      _
    $region7: #{tpu_custom_call.1} parent=1 // pred_check_branch
      %18 = sbr.rel (0) target = $region9
    $region8: #{tpu_custom_call.1} parent=1 // pred_region
      _
    $region9: #{tpu_custom_call.1} parent=1 // pred_fallthru
      _
    // Predicated region
    $region10: #{tpu_custom_call.1} parent=1 // pred_check
      _
    $region11: #{tpu_custom_call.1} parent=1 // pred_check_branch
      %20 = sbr.rel (0) target = $region13
    $region12: #{tpu_custom_call.1} parent=1 // pred_region
      _
    $region13: #{tpu_custom_call.1} parent=1 // pred_fallthru
      _
    // Predicated region
    $region14: #{tpu_custom_call.1} parent=1 // pred_check
      _
    $region15: #{tpu_custom_call.1} parent=1 // pred_check_branch
      %22 = sbr.rel (0) target = $region17
    $region16: #{tpu_custom_call.1} parent=1 // pred_region
      _
    $region17: #{tpu_custom_call.1} parent=1 // pred_fallthru
      _
    // Predicated region
    $region18: #{tpu_custom_call.1} parent=1 // pred_check
      _
    $region19: #{tpu_custom_call.1} parent=1 // pred_check_branch
      %24 = sbr.rel (0) target = $region21
    $region20: #{tpu_custom_call.1} parent=1 // pred_region
      _
    $region21: #{tpu_custom_call.1} parent=1 // pred_fallthru
      _
    // Predicated region
    $region22: #{tpu_custom_call.1} parent=1 // pred_check
      _
    $region23: #{tpu_custom_call.1} parent=1 // pred_check_branch
      %26 = sbr.rel (0) target = $region25
    $region24: #{tpu_custom_call.1} parent=1 // pred_region
      _
    $region25: #{tpu_custom_call.1} parent=1 // pred_fallthru
      _
    // Predicated region
    $region26: #{tpu_custom_call.1} parent=1 // pred_check
      _
    $region27: #{tpu_custom_call.1} parent=1 // pred_check_branch
      %28 = sbr.rel (0) target = $region29
    $region28: #{tpu_custom_call.1} parent=1 // pred_region
      _
    $region29: #{tpu_custom_call.1} parent=1 // pred_fallthru
      _
    // Predicated region
    $region30: #{tpu_custom_call.1} parent=1 // pred_check
      _
    $region31: #{tpu_custom_call.1} parent=1 // pred_check_branch
      %30 = sbr.rel (0) target = $region33
    $region32: #{tpu_custom_call.1} parent=1 // pred_region
      _
    $region33: #{tpu_custom_call.1} parent=1 // pred_fallthru
      _
    // Predicated region
    $region34: #{tpu_custom_call.1} parent=1 // pred_check
      _
    $region35: #{tpu_custom_call.1} parent=1 // pred_check_branch
      %32 = sbr.rel (0) target = $region37
    $region36: #{tpu_custom_call.1} parent=1 // pred_region
      _
    $region37: #{tpu_custom_call.1} parent=1 // pred_fallthru
      _
    %v33 = vlaneseq
    %v34 = vand.u32 %v33, 127
    %vm35 = vcmp.lt.s32.totalorder %v34, 0
    %v36 = vsub.s32 0, %v34
    %v37 = vsel %vm35, %v36, %v34
    %v38 = vshrl.u32 %v37, 3
    %v39 = vand.u32 %v37, 7
    %v40 = vsub.s32 0, %v39
    %v41 = vsel %vm35, %v40, %v39
    %vm42 = vcmp.ne.s32.totalorder %v41, 0
    %vm43 = vcmp.lt.s32.totalorder %v41, 0
    %vm44 = vmand %vm43, %vm42
    %v45 = vadd.s32 %v41, 8
    %v46 = vsel %vm44, %v45, %v41
    %vm47 = vcmp.eq.s32.totalorder %v46, 0
    %vm48 = vcmp.eq.s32.totalorder %v46, 7
    %v49 = vld [vmem:[%s1] sm:$0xff]
    %v50 = vld [vmem:[%s2] sm:$0xff]
    %v51 = vld [vmem:[%s0] sm:$0xff]
    %53 = vset.pattern.permute.xlu0 0
    %54 = vperm.xlu0 %53, %v49
    %v55 = vpop.permute.xlu0 %54
    %v57 = vmul.f32 %v51, %v55
    %59 = vset.pattern.permute.xlu0 0
    %60 = vperm.xlu0 %59, %v50
    %v61 = vpop.permute.xlu0 %60
    %v63 = vadd.f32 %v57, %v61
    %v64 = vmax.f32 %v63, 0.0
    %s65 = scalar_lea.vmem %s0, 8
    %v66 = vld [vmem:[%s65] sm:$0xff]
    %v67 = vmul.f32 %v66, %v55
    %v68 = vadd.f32 %v67, %v61
    %v69 = vmax.f32 %v68, 0.0
    %71 = vrot.lane.b32.xlu0 %v69, 1
    %v72 = vpop.permute.xlu0 %71
    %vm74 = vcmask 7168
    %v75 = vsel %vm74, 0.0, %v72
    %v76 = vsel %vm47, 1, 0
    %vm77 = vcmp.eq.s32.totalorder %v76, 1
    %v78 = vsel %vm77, 0.0, %v75
    %vm79 = vcmask 130048
    %80 = vst.msk [vmem:[#allocation2] sm:$0xff] %vm79, %v78
    %81 = vst.msk [vmem:[#allocation2 + $0x8] sm:$0xff] %vm79, %v64
    %82 = vst.msk [vmem:[#allocation2 + $0x10] sm:$0xff] %vm79, %v69
    %v83 = vld [vmem:[%s3] sm:$0xff]
    %v84 = vld [vmem:[#allocation2] sm:$0xff]
    %v85 = vld [vmem:[#allocation2 + $0x8] sm:$0xff]
    %v86 = vld [vmem:[#allocation2 + $0x10] sm:$0xff]
    %vm87 = vcmask 195584
    %v89 = vsel %vm87, %v83, 0
    %91 = vmatpush.msra.mxu0 0.0
    %92 = vmatpush.msra.mxu0 0.0
    %93 = vmatpush.msra.mxu0 0.0
    %94 = vmatpush.msra.mxu0 0.0
    %95 = vmatpush.msra.mxu0 0.0
    %96 = vmatpush.msra.mxu0 0.0
    %97 = vmatpush.msra.mxu0 0.0
    %98 = vmatpush.msra.mxu0 0.0
    %99 = vmatpush.msra.mxu0 0.0
    %100 = vmatpush.msra.mxu0 0.0
    %101 = vmatpush.msra.mxu0 0.0
    %102 = vmatpush.msra.mxu0 0.0
    %103 = vmatpush.msra.mxu0 0.0
    %104 = vmatpush.msra.mxu0 %v86
    %105 = vmatpush.msra.mxu0 %v85
    %106 = vmatpush.msra.mxu0 %v84
    %107 = vmatmul.f32.gmra.mxu0 %v89
    %v108 = vpop.f32.mrf.mxu0
    %v109 = vadd.f32 0.0, %v108
    %110 = vdwg.mxu0
    %v111 = vld [vmem:[%s4] sm:$0xff]
    %113 = vset.pattern.permute.xlu0 0
    %114 = vperm.xlu0 %113, %v111
    %v115 = vpop.permute.xlu0 %114
    %v117 = vmul.f32 %v109, %v115
    %v118 = vld [vmem:[%s5] sm:$0xff]
    %120 = vset.pattern.permute.xlu0 0
    %121 = vperm.xlu0 %120, %v118
    %v122 = vpop.permute.xlu0 %121
    %v124 = vadd.f32 %v117, %v122
    %v125 = vmax.f32 %v124, 0.0
    %127 = vrot.lane.b32.xlu0 %v125, 1
    %v128 = vpop.permute.xlu0 %127
    %v130 = vsel %vm74, 0.0, %v128
    %v131 = vsel %vm77, 0.0, %v130
    %132 = vst.msk [vmem:[#allocation2] sm:$0xff] %vm79, %v131
    %133 = vst.msk [vmem:[#allocation2 + $0x8] sm:$0xff] %vm79, %v125
    %134 = vrot.lane.b32.xlu0 %v125, 127
    %v135 = vpop.permute.xlu0 %134
    %vm137 = vcmask 121856
    %v138 = vsel %vm137, %v135, 0.0
    %v139 = vsel %vm48, 1, 0
    %vm140 = vcmp.eq.s32.totalorder %v139, 1
    %v141 = vsel %vm140, 0.0, %v138
    %142 = vst.msk [vmem:[#allocation2 + $0x10] sm:$0xff] %vm79, %v141
    %v143 = vld [vmem:[%s6] sm:$0xff]
    %v144 = vld [vmem:[#allocation2] sm:$0xff]
    %v145 = vld [vmem:[#allocation2 + $0x8] sm:$0xff]
    %v146 = vld [vmem:[#allocation2 + $0x10] sm:$0xff]
    %v147 = vld [vmem:[%s7] sm:$0xff]
    %149 = vset.pattern.permute.xlu0 0
    %150 = vperm.xlu0 %149, %v147
    %v151 = vpop.permute.xlu0 %150
    %v154 = vsel %vm87, %v143, 0
    %156 = vmatpush.msra.mxu0 0.0
    %157 = vmatpush.msra.mxu0 0.0
    %158 = vmatpush.msra.mxu0 0.0
    %159 = vmatpush.msra.mxu0 0.0
    %160 = vmatpush.msra.mxu0 0.0
    %161 = vmatpush.msra.mxu0 0.0
    %162 = vmatpush.msra.mxu0 0.0
    %163 = vmatpush.msra.mxu0 0.0
    %164 = vmatpush.msra.mxu0 0.0
    %165 = vmatpush.msra.mxu0 0.0
    %166 = vmatpush.msra.mxu0 0.0
    %167 = vmatpush.msra.mxu0 0.0
    %168 = vmatpush.msra.mxu0 0.0
    %169 = vmatpush.msra.mxu0 %v146
    %170 = vmatpush.msra.mxu0 %v145
    %171 = vmatpush.msra.mxu0 %v144
    %172 = vmatmul.f32.gmra.mxu0 %v154
    %v173 = vpop.f32.mrf.mxu0
    %v174 = vadd.f32 %v151, %v173
    %175 = vdwg.mxu0
    %v176 = vld [vmem:[%s0] sm:$0xff]
    %v177 = vld [vmem:[%s8] sm:$0xff]
    %vm178 = vcmask 64512
    %v180 = vsel %vm178, %v177, 0
    %182 = vmatpush.msra.mxu0 0.0
    %183 = vmatpush.msra.mxu0 0.0
    %184 = vmatpush.msra.mxu0 0.0
    %185 = vmatpush.msra.mxu0 0.0
    %186 = vmatpush.msra.mxu0 0.0
    %187 = vmatpush.msra.mxu0 0.0
    %188 = vmatpush.msra.mxu0 0.0
    %189 = vmatpush.msra.mxu0 0.0
    %190 = vmatpush.msra.mxu0 0.0
    %191 = vmatpush.msra.mxu0 0.0
    %192 = vmatpush.msra.mxu0 0.0
    %193 = vmatpush.msra.mxu0 0.0
    %194 = vmatpush.msra.mxu0 0.0
    %195 = vmatpush.msra.mxu0 0.0
    %196 = vmatpush.msra.mxu0 0.0
    %197 = vmatpush.msra.mxu0 %v176
    %198 = vmatmul.f32.gmra.mxu0 %v180
    %v199 = vpop.f32.mrf.mxu0
    %v200 = vadd.f32 0.0, %v199
    %201 = vdwg.mxu0
    %v202 = vadd.f32 %v174, %v200
    %203 = vst.msk [vmem:[#allocation3] sm:$0xff] %vm79, %v202
    // Predicated region
    $region38: #{tpu_custom_call.1} parent=1 // pred_check
      _
    $region39: #{tpu_custom_call.1} parent=1 // pred_check_branch
      %205 = sbr.rel (0) target = $region41
    $region40: #{tpu_custom_call.1} parent=1 // pred_region
      %207 = vsyncadd [#allocation4], 0
      %s209 = sshll.u32 [#allocation3], 4
      %s210 = int_to_ptr.vmem [resolvable:$true] %s209
      %s211 = sshll.u32 %s9, 4
      %s212 = int_to_ptr.hbm [resolvable:$true] %s211
      %214 = dma.vmem_to_hbm [thread:$0]  %s210, 128, %s212, [#allocation4]
    $region41: #{tpu_custom_call.1} parent=1 // pred_fallthru
      _
    // Predicated region
    $region42: #{tpu_custom_call.1} parent=1 // pred_check
      _
    $region43: #{tpu_custom_call.1} parent=1 // pred_check_branch
      %216 = sbr.rel (0) target = $region45
    $region44: #{tpu_custom_call.1} parent=1 // pred_region
      %218 = dma.done [#allocation4], 128
    $region45: #{tpu_custom_call.1} parent=1 // pred_fallthru
      _
    %219 = vsyncpa [#allocation4], 1

</llo_original>
